<compile_context>
chip_gen: v7x
topology: tpu7x:2x2x1
jax: 0.10.0
libtpu: 0.0.40
codegen_flags: <defaults>
</compile_context>

<pallas_src>
import jax
import jax.numpy as jnp
from jax.experimental import pallas as pl
from jax.experimental.pallas import tpu as pltpu


def _combine_heads_kernel(x_ref, o_ref):
    """x_ref: (1, S_TILE, D) VMEM tile; o_ref: (1, d_k, S_TILE*H) lane-dense tile.

    out_flat[0, d, s*H + h] = x[0, s, d*H + h]
    """
    _, s_tile, D = x_ref.shape
    _, d_k, _ = o_ref.shape
    H = D // d_k
    x = x_ref[0, :, :]                                        # (S_TILE, D)
    y = jnp.transpose(x.reshape(s_tile, d_k, H), (1, 0, 2))   # (d_k, S_TILE, H)
    o_ref[0, :, :] = y.reshape(d_k, s_tile * H)               # lane-dense store


def _pick_s_tile(S, D, H, itemsize, target_block_bytes):
    """Largest S tile that (a) divides S, (b) keeps both blocks layout-legal
    (sublane-aligned input rows, 128-lane-aligned flat output), and
    (c) fits the per-block VMEM budget.  Falls back to the full-extent block
    (always legal)."""
    sublane = {4: 8, 2: 16, 1: 32}.get(itemsize, 8)
    valid = [S]  # full-extent block is always legal regardless of alignment
    for t in range(1, S):
        if S % t:
            continue
        if t % sublane:
            continue
        if (t * H) % 128:
            continue
        valid.append(t)
    fitting = [t for t in valid if t * D * itemsize <= target_block_bytes]
    return max(fitting) if fitting else min(valid)


def combine_attention_heads(x, num_heads, target_block_bytes=2 << 20):
    """x: (B, S, D) -> (B, D // num_heads, S, num_heads)."""
    B, S, D = x.shape
    assert D % num_heads == 0, "model_dimensionality must be divisible by num_heads"
    d_k = D // num_heads
    itemsize = jnp.dtype(x.dtype).itemsize

    s_tile = _pick_s_tile(S, D, num_heads, itemsize, target_block_bytes)
    n_s = S // s_tile

    flat = pl.pallas_call(
        _combine_heads_kernel,
        out_shape=jax.ShapeDtypeStruct((B, d_k, S * num_heads), x.dtype),
        grid_spec=pltpu.PrefetchScalarGridSpec(
            num_scalar_prefetch=0,
            grid=(B, n_s),
            in_specs=[pl.BlockSpec((1, s_tile, D), lambda b, s: (b, s, 0))],
            out_specs=pl.BlockSpec(
                (1, d_k, s_tile * num_heads), lambda b, s: (b, 0, s)
            ),
        ),
        compiler_params=pltpu.CompilerParams(
            dimension_semantics=("parallel", "parallel")
        ),
        cost_estimate=pl.CostEstimate(
            flops=0,
            transcendentals=0,
            bytes_accessed=2 * B * S * D * itemsize,
        ),
    )(x)

    # Free metadata reshape: (B, d_k, S*H) -> (B, d_k, S, H).
    return flat.reshape(B, d_k, S, num_heads)


def _reference(x, num_heads):
    B, S, D = x.shape
    return jnp.transpose(x.reshape(B, S, D // num_heads, num_heads), (0, 2, 1, 3))


if __name__ == "__main__":
    key = jax.random.PRNGKey(0)

    # Case 1: tiny shape consistent with the module (model_dim=32, num_heads=4 -> d_k=8).
    # Exercises the full-S (full-extent minor) block path.
    B, S, D, H = 2, 8, 32, 4
    x1 = jax.random.normal(key, (B, S, D), dtype=jnp.float32)
    y1 = jax.block_until_ready(combine_attention_heads(x1, num_heads=H))
    ref1 = _reference(x1, H)
    assert y1.shape == (B, D // H, S, H), y1.shape
    assert y1.dtype == x1.dtype
    assert jnp.array_equal(y1, ref1), "Pallas output mismatch vs reference (case 1)"

    # Case 2: exercises the S-tiled, 128-lane-aligned output path
    # (small VMEM budget forces S_TILE=32, so S_TILE*H = 128 exactly).
    B2, S2, D2, H2 = 2, 64, 128, 4
    x2 = jax.random.normal(jax.random.PRNGKey(0), (B2, S2, D2), dtype=jnp.float32)
    y2 = jax.block_until_ready(
        combine_attention_heads(x2, num_heads=H2, target_block_bytes=16 << 10)
    )
    ref2 = _reference(x2, H2)
    assert y2.shape == (B2, D2 // H2, S2, H2), y2.shape
    assert jnp.array_equal(y2, ref2), "Pallas output mismatch vs reference (case 2)"

    print("KERNEL_OK")
</pallas_src>

<mosaic_0001>
module attributes {stable_mosaic.version = 11 : i64} {
  func.func @_combine_heads_kernel(%arg0: i32, %arg1: i32, %arg2: memref<1x8x32xf32, #tpu.memory_space<vmem>>, %arg3: memref<1x8x32xf32, #tpu.memory_space<vmem>>) attributes {dimension_semantics = [#tpu.dimension_semantics<parallel>, #tpu.dimension_semantics<parallel>], iteration_bounds = array<i64: 2, 1>, scalar_prefetch = 0 : i64, scratch_operands = 0 : i64, tpu.core_type = #tpu.core_type<tc>, window_params = [{transform_indices = @transform_0, window_bounds = array<i64: 1, 8, 32>}, {transform_indices = @transform_1, window_bounds = array<i64: 1, 8, 32>}]} {
    %c0 = arith.constant 0 : index
    %c0_0 = arith.constant 0 : index
    %c0_1 = arith.constant 0 : index
    %0 = vector.load %arg2[%c0, %c0_0, %c0_1] : memref<1x8x32xf32, #tpu.memory_space<vmem>>, vector<1x8x32xf32>
    %1 = vector.shape_cast %0 : vector<1x8x32xf32> to vector<8x32xf32>
    %2 = vector.shape_cast %1 : vector<8x32xf32> to vector<8x8x4xf32>
    %3 = tpu.transpose %2, [1, 0, 2] : vector<8x8x4xf32> -> vector<8x8x4xf32>
    %4 = vector.shape_cast %3 : vector<8x8x4xf32> to vector<8x32xf32>
    %c0_2 = arith.constant 0 : index
    %c0_3 = arith.constant 0 : index
    %c0_4 = arith.constant 0 : index
    %5 = vector.load %arg3[%c0_2, %c0_3, %c0_4] : memref<1x8x32xf32, #tpu.memory_space<vmem>>, vector<1x8x32xf32>
    %6 = vector.shape_cast %5 : vector<1x8x32xf32> to vector<8x32xf32>
    %7 = vector.shape_cast %4 : vector<8x32xf32> to vector<1x8x32xf32>
    tpu.vector_store %arg3[%c0_2, %c0_3, %c0_4], %7 {strides = array<i32>} : memref<1x8x32xf32, #tpu.memory_space<vmem>>, vector<1x8x32xf32>,
    return
  }
  func.func @transform_0(%arg0: i32, %arg1: i32) -> (i32, i32, i32) {
    %c0_i32 = arith.constant 0 : i32
    %c0_i32_0 = arith.constant 0 : i32
    return %arg0, %arg1, %c0_i32 : i32, i32, i32
  }
  func.func @transform_1(%arg0: i32, %arg1: i32) -> (i32, i32, i32) {
    %c0_i32 = arith.constant 0 : i32
    %c0_i32_0 = arith.constant 0 : i32
    return %arg0, %c0_i32, %arg1 : i32, i32, i32
  }
}

</mosaic_0001>

<llo_original>
// kernel: tpu_custom_call.1
$region0: #{tpu_custom_call.1}
  #allocation0 [shape = 'u32[]', space=smem, size = 0x4, offset = 0x4, fixed_abs, tag = 'smem constant byte address 0x4 - core index']
  #allocation1 [shape = 'u32[144,128]{1,0:T(1,128)}', space=vmem, size = 0x12000, scoped, tag = 'internal scratch']
  %s0 = inlined_call_operand.hbm [shape: f32[2,8,32], index: 0, kind: input, shape index: {}]
  %s1 = inlined_call_operand.hbm [shape: f32[2,8,32], index: 1, kind: output, shape index: {}]
  %s2 = sld [smem:[#allocation0]]
  $region41: #{tpu_custom_call.1} parent=0
    _
  %s4 = ssub.s32 1, %s2
  %s5 = scalar_select 0, %s4, %s2
  $region1: #{tpu_custom_call.1} parent=0
    #allocation2 [shape = 'u8[8192]{0}', space=vmem, size = 0x2000, scoped, tag = 'input window, operand 0']
    #allocation3 [shape = 's32[2]{0}', space=sflag, size = 0x8, scoped, tag = 'scoped memory for tpu_custom_call.1']
    #allocation4 [shape = 's32[2]{0}', space=sflag, size = 0x8, scoped, tag = 'scoped memory for tpu_custom_call.1']
    #allocation5 [shape = 'u8[8192]{0}', space=vmem, size = 0x2000, scoped, tag = 'output window, operand 0']
    %6 = vsyncpa [#allocation3], 0
    %s7 = scalar_lea.sflag [#allocation3], 1
    %8 = vsyncpa %s7, 0
    %9 = vsyncpa [#allocation4], 0
    %s10 = scalar_lea.sflag [#allocation4], 1
    %11 = vsyncpa %s10, 0
    loop: start=0, step=1, limit=4
    $region2: #{tpu_custom_call.1} parent=1 // loop_pre_header
      _
    $region3: #{tpu_custom_call.1} parent=1 // loop_header
      %s13 = sphi 0, %s17
      %p14 = scmp.ge.s32.totalorder %s13, 4
      %s20 = sphi 0, %s32
      %s21 = sphi 0, %s28
      %s22 = sphi 0, %s20
      %s23 = sphi 0, %s21
      %s24 = sphi 0, %s22
      %s25 = sphi 0, %s23
      %s37 = sphi 0, %s39
      %s40 = sphi 0, %s37
      %s41 = sphi 0, %s40
      %s57 = sphi 0, %s41
      %s65 = sphi 0, %s67
      %s68 = sphi 0, %s65
      %s69 = sphi 0, %s68
      %s85 = sphi 0, %s69
    $region4: #{tpu_custom_call.1} parent=1 // loop_header_branch
      %16 = sbr.rel (%p14) target = $region8
    $region5: #{tpu_custom_call.1} parent=1 // loop_body
      %s18 = ssub.s32 %s13, 1
      %s19 = ssub.s32 %s13, 2
      %s26 = sadd.s32 1, %s21
      %p27 = scmp.ge.s32.totalorder %s26, 1
      %s28 = scalar_select %p27, 0, %s26
      %s29 = sadd.s32 1, %s20
      %s30 = scalar_select %p27, %s29, %s20
      %p31 = scmp.ge.s32.totalorder %s30, 2
      %s32 = scalar_select %p31, 0, %s30
      %s33 = ssub.s32 %s20, %s32
      %s34 = ssub.s32 %s21, %s28
      %s35 = sor.u32 %s33, %s34
      %p36 = scmp.eq.s32.totalorder %s35, 0
      %s38 = sadd.s32 %s37, 1
      %s39 = scalar_select %p36, %s37, %s38
      %p42 = pneg %p36
      %p43 = scmp.eq.s32.totalorder %s13, 1
      %p44 = por %p42, %p43
      %p45 = scmp.ne.s32.totalorder %s37, %s40
      %p46 = scmp.eq.s32.totalorder %s13, 0
      %p47 = por %p45, %p46
      %p48 = scmp.ne.s32.totalorder %s37, %s40
      %p49 = scmp.eq.s32.totalorder %s18, 1
      %p50 = por %p48, %p49
      %p51 = scmp.ne.s32.totalorder %s40, %s41
      %p52 = scmp.eq.s32.totalorder %s18, 0
      %p53 = por %p51, %p52
      %p54 = scmp.ne.s32.totalorder %s40, %s41
      %p55 = scmp.eq.s32.totalorder %s19, 1
      %p56 = por %p54, %p55
      %p58 = scmp.ne.s32.totalorder %s41, %s57
      %p59 = scmp.eq.s32.totalorder %s19, 0
      %p60 = por %p58, %p59
      %s61 = ssub.s32 %s20, %s32
      %s62 = ssub.s32 %s21, %s28
      %s63 = sor.u32 %s61, %s62
      %p64 = scmp.eq.s32.totalorder %s63, 0
      %s66 = sadd.s32 %s65, 1
      %s67 = scalar_select %p64, %s65, %s66
      %p70 = pneg %p64
      %p71 = scmp.eq.s32.totalorder %s13, 1
      %p72 = por %p70, %p71
      %p73 = scmp.ne.s32.totalorder %s65, %s68
      %p74 = scmp.eq.s32.totalorder %s13, 0
      %p75 = por %p73, %p74
      %p76 = scmp.ne.s32.totalorder %s65, %s68
      %p77 = scmp.eq.s32.totalorder %s18, 1
      %p78 = por %p76, %p77
      %p79 = scmp.ne.s32.totalorder %s68, %s69
      %p80 = scmp.eq.s32.totalorder %s18, 0
      %p81 = por %p79, %p80
      %p82 = scmp.ne.s32.totalorder %s68, %s69
      %p83 = scmp.eq.s32.totalorder %s19, 1
      %p84 = por %p82, %p83
      %p86 = scmp.ne.s32.totalorder %s69, %s85
      %p87 = scmp.eq.s32.totalorder %s19, 0
      %p88 = por %p86, %p87
      %p89 = scmp.le.s32.totalorder 1, %s13
      %p90 = scmp.lt.s32.totalorder %s13, 3
      %p91 = pnand %p89, %p90
      %p92 = pneg %p91
      // Predicated region
      $region9: #{tpu_custom_call.1} parent=5 // pred_check
        _
      $region10: #{tpu_custom_call.1} parent=5 // pred_check_branch
        %94 = sbr.rel (%p91) target = $region12
      $region11: #{tpu_custom_call.1} parent=5 // pred_region
        %s95 = ssub.s32 %s13, 1
      $region12: #{tpu_custom_call.1} parent=5 // pred_fallthru
        _
      %p96 = scmp.lt.s32.totalorder %s13, 2
      // Predicated region
      $region13: #{tpu_custom_call.1} parent=5 // pred_check
        %p97 = pneg %p96
      $region14: #{tpu_custom_call.1} parent=5 // pred_check_branch
        %99 = sbr.rel (%p97) target = $region16
      $region15: #{tpu_custom_call.1} parent=5 // pred_region
        // Predicated region
        $region17: #{tpu_custom_call.1} parent=15 // pred_check
          %p100 = pneg %p47
        $region18: #{tpu_custom_call.1} parent=15 // pred_check_branch
          %102 = sbr.rel (%p100) target = $region20
        $region19: #{tpu_custom_call.1} parent=15 // pred_region
          %s103 = sand.u32 %s37, 1
          %s104 = scalar_lea.sflag [#allocation3], %s103
          %s105 = sand.u32 %s37, 1
          %s106 = smul.addr %s105, 8
          %s107 = scalar_lea.vmem [#allocation2], %s106
          %s109 = ssub.s32 128, 128
          %110 = vsyncadd %s104, %s109
          %s111 = sadd.s32 %s21, %s20
          %s112 = smul.addr %s111, 128
          %s113 = scalar_lea.hbm %s0, %s112
          %s115 = sshll.u32 %s107, 4
          %s116 = int_to_ptr.vmem [resolvable:$true] %s115
          %118 = dma.hbm_to_vmem [thread:$0]  %s113, 128, %s116, %s104
        $region20: #{tpu_custom_call.1} parent=15 // pred_fallthru
          _
      $region16: #{tpu_custom_call.1} parent=5 // pred_fallthru
        _
      %p119 = scmp.le.s32.totalorder 1, %s13
      %p120 = scmp.lt.s32.totalorder %s13, 3
      %p121 = pnand %p119, %p120
      %p122 = pneg %p121
      // Predicated region
      $region21: #{tpu_custom_call.1} parent=5 // pred_check
        _
      $region22: #{tpu_custom_call.1} parent=5 // pred_check_branch
        %124 = sbr.rel (%p121) target = $region24
      $region23: #{tpu_custom_call.1} parent=5 // pred_region
        %s125 = ssub.s32 %s13, 1
        %s126 = sand.u32 %s40, 1
        %s127 = scalar_lea.sflag [#allocation3], %s126
        %s128 = sand.u32 %s40, 1
        %s129 = smul.addr %s128, 8
        %s130 = scalar_lea.vmem [#allocation2], %s129
        // Predicated region
        $region25: #{tpu_custom_call.1} parent=23 // pred_check
          %p131 = pneg %p53
        $region26: #{tpu_custom_call.1} parent=23 // pred_check_branch
          %133 = sbr.rel (%p131) target = $region28
        $region27: #{tpu_custom_call.1} parent=23 // pred_region
          %134 = dma.done %s127, 128
        $region28: #{tpu_custom_call.1} parent=23 // pred_fallthru
          _
        %s135 = sand.u32 %s40, 1
        %s136 = scalar_lea.sflag [#allocation3], %s135
        %s137 = sand.u32 %s40, 1
        %s138 = smul.addr %s137, 8
        %s139 = scalar_lea.vmem [#allocation2], %s138
        %p140 = pneg %p53
        %p141 = pneg %p50
        %p142 = pneg %p81
        %p143 = pneg %p78
        %s144 = sand.u32 %s68, 1
        %s145 = scalar_lea.sflag [#allocation4], %s144
        %s146 = sand.u32 %s68, 1
        %s147 = smul.addr %s146, 8
        %s148 = scalar_lea.vmem [#allocation5], %s147
        %v149 = vld [vmem:[%s130] sm:$0xff]
        %151 = vrot.lane.b32.xlu0 %v149, 124
        %v152 = vpop.permute.xlu0 %151
        %154 = vrot.lane.b32.xlu0 %v149, 120
        %v155 = vpop.permute.xlu0 %154
        %157 = vrot.lane.b32.xlu0 %v149, 116
        %v158 = vpop.permute.xlu0 %157
        %160 = vrot.lane.b32.xlu0 %v149, 112
        %v161 = vpop.permute.xlu0 %160
        %163 = vrot.lane.b32.xlu0 %v149, 108
        %v164 = vpop.permute.xlu0 %163
        %166 = vrot.lane.b32.xlu0 %v149, 104
        %v167 = vpop.permute.xlu0 %166
        %169 = vrot.lane.b32.xlu0 %v149, 100
        %v170 = vpop.permute.xlu0 %169
        %v172 = vcombine.low %v149, %v155
        %v173 = vcombine.high %v149, %v155
        %v175 = vunpack.c.l.s4 1983009808
        %v176 = vunpack.c.0.s8 %v175
        %v177 = vlaneseq
        %v178 = vshrl.u32 %v177, 7
        %v179 = vsub.s32 %v176, %v178
        %v180 = vrot.slane %v172, %v179
        %v182 = vunpack.c.l.s4 1983009808
        %v183 = vunpack.c.0.s8 %v182
        %v184 = vlaneseq
        %v185 = vshrl.u32 %v184, 7
        %v186 = vsub.s32 %v183, %v185
        %v187 = vrot.slane %v173, %v186
        %v188 = vcombine.low %v152, %v158
        %v189 = vcombine.high %v152, %v158
        %v191 = vunpack.c.l.s4 1983009808
        %v192 = vunpack.c.0.s8 %v191
        %v193 = vlaneseq
        %v194 = vshrl.u32 %v193, 7
        %v195 = vsub.s32 %v192, %v194
        %v196 = vrot.slane %v188, %v195
        %v198 = vunpack.c.l.s4 1983009808
        %v199 = vunpack.c.0.s8 %v198
        %v200 = vlaneseq
        %v201 = vshrl.u32 %v200, 7
        %v202 = vsub.s32 %v199, %v201
        %v203 = vrot.slane %v189, %v202
        %v204 = vcombine.low %v161, %v167
        %v205 = vcombine.high %v161, %v167
        %v207 = vunpack.c.l.s4 1983009808
        %v208 = vunpack.c.0.s8 %v207
        %v209 = vlaneseq
        %v210 = vshrl.u32 %v209, 7
        %v211 = vsub.s32 %v208, %v210
        %v212 = vrot.slane %v204, %v211
        %v214 = vunpack.c.l.s4 1983009808
        %v215 = vunpack.c.0.s8 %v214
        %v216 = vlaneseq
        %v217 = vshrl.u32 %v216, 7
        %v218 = vsub.s32 %v215, %v217
        %v219 = vrot.slane %v205, %v218
        %v220 = vcombine.low %v164, %v170
        %v221 = vcombine.high %v164, %v170
        %v223 = vunpack.c.l.s4 1983009808
        %v224 = vunpack.c.0.s8 %v223
        %v225 = vlaneseq
        %v226 = vshrl.u32 %v225, 7
        %v227 = vsub.s32 %v224, %v226
        %v228 = vrot.slane %v220, %v227
        %v230 = vunpack.c.l.s4 1983009808
        %v231 = vunpack.c.0.s8 %v230
        %v232 = vlaneseq
        %v233 = vshrl.u32 %v232, 7
        %v234 = vsub.s32 %v231, %v233
        %v235 = vrot.slane %v221, %v234
        %v236 = vcombine.low %v180, %v196
        %v237 = vcombine.high %v180, %v196
        %v239 = vunpack.c.l.s4 1934713408
        %v240 = vunpack.c.0.s8 %v239
        %v241 = vlaneseq
        %v242 = vshrl.u32 %v241, 7
        %v243 = vsub.s32 %v240, %v242
        %v244 = vrot.slane %v236, %v243
        %v246 = vunpack.c.l.s4 1934713408
        %v247 = vunpack.c.0.s8 %v246
        %v248 = vlaneseq
        %v249 = vshrl.u32 %v248, 7
        %v250 = vsub.s32 %v247, %v249
        %v251 = vrot.slane %v237, %v250
        %v252 = vcombine.low %v187, %v203
        %v253 = vcombine.high %v187, %v203
        %v255 = vunpack.c.l.s4 1934713408
        %v256 = vunpack.c.0.s8 %v255
        %v257 = vlaneseq
        %v258 = vshrl.u32 %v257, 7
        %v259 = vsub.s32 %v256, %v258
        %v260 = vrot.slane %v252, %v259
        %v262 = vunpack.c.l.s4 1934713408
        %v263 = vunpack.c.0.s8 %v262
        %v264 = vlaneseq
        %v265 = vshrl.u32 %v264, 7
        %v266 = vsub.s32 %v263, %v265
        %v267 = vrot.slane %v253, %v266
        %v268 = vcombine.low %v212, %v228
        %v269 = vcombine.high %v212, %v228
        %v271 = vunpack.c.l.s4 1934713408
        %v272 = vunpack.c.0.s8 %v271
        %v273 = vlaneseq
        %v274 = vshrl.u32 %v273, 7
        %v275 = vsub.s32 %v272, %v274
        %v276 = vrot.slane %v268, %v275
        %v278 = vunpack.c.l.s4 1934713408
        %v279 = vunpack.c.0.s8 %v278
        %v280 = vlaneseq
        %v281 = vshrl.u32 %v280, 7
        %v282 = vsub.s32 %v279, %v281
        %v283 = vrot.slane %v269, %v282
        %v284 = vcombine.low %v219, %v235
        %v285 = vcombine.high %v219, %v235
        %v287 = vunpack.c.l.s4 1934713408
        %v288 = vunpack.c.0.s8 %v287
        %v289 = vlaneseq
        %v290 = vshrl.u32 %v289, 7
        %v291 = vsub.s32 %v288, %v290
        %v292 = vrot.slane %v284, %v291
        %v294 = vunpack.c.l.s4 1934713408
        %v295 = vunpack.c.0.s8 %v294
        %v296 = vlaneseq
        %v297 = vshrl.u32 %v296, 7
        %v298 = vsub.s32 %v295, %v297
        %v299 = vrot.slane %v285, %v298
        %v300 = vcombine.low %v244, %v276
        %v301 = vcombine.high %v244, %v276
        %v302 = vcombine.low %v251, %v283
        %v303 = vcombine.high %v251, %v283
        %v304 = vcombine.low %v260, %v292
        %v305 = vcombine.high %v260, %v292
        %v306 = vcombine.low %v267, %v299
        %v307 = vcombine.high %v267, %v299
        %v308 = vcombine.low %v300, %v302
        %v309 = vcombine.high %v300, %v302
        %v311 = vunpack.c.l.s4 1983009808
        %v312 = vunpack.c.0.s8 %v311
        %v313 = vlaneseq
        %v314 = vshrl.u32 %v313, 7
        %v315 = vsub.s32 %v312, %v314
        %v316 = vrot.slane %v308, %v315
        %v318 = vunpack.c.l.s4 1983009808
        %v319 = vunpack.c.0.s8 %v318
        %v320 = vlaneseq
        %v321 = vshrl.u32 %v320, 7
        %v322 = vsub.s32 %v319, %v321
        %v323 = vrot.slane %v309, %v322
        %v324 = vcombine.low %v301, %v303
        %v325 = vcombine.high %v301, %v303
        %v327 = vunpack.c.l.s4 1983009808
        %v328 = vunpack.c.0.s8 %v327
        %v329 = vlaneseq
        %v330 = vshrl.u32 %v329, 7
        %v331 = vsub.s32 %v328, %v330
        %v332 = vrot.slane %v324, %v331
        %v334 = vunpack.c.l.s4 1983009808
        %v335 = vunpack.c.0.s8 %v334
        %v336 = vlaneseq
        %v337 = vshrl.u32 %v336, 7
        %v338 = vsub.s32 %v335, %v337
        %v339 = vrot.slane %v325, %v338
        %v340 = vcombine.low %v304, %v306
        %v341 = vcombine.high %v304, %v306
        %v343 = vunpack.c.l.s4 1983009808
        %v344 = vunpack.c.0.s8 %v343
        %v345 = vlaneseq
        %v346 = vshrl.u32 %v345, 7
        %v347 = vsub.s32 %v344, %v346
        %v348 = vrot.slane %v340, %v347
        %v350 = vunpack.c.l.s4 1983009808
        %v351 = vunpack.c.0.s8 %v350
        %v352 = vlaneseq
        %v353 = vshrl.u32 %v352, 7
        %v354 = vsub.s32 %v351, %v353
        %v355 = vrot.slane %v341, %v354
        %v356 = vcombine.low %v305, %v307
        %v357 = vcombine.high %v305, %v307
        %v359 = vunpack.c.l.s4 1983009808
        %v360 = vunpack.c.0.s8 %v359
        %v361 = vlaneseq
        %v362 = vshrl.u32 %v361, 7
        %v363 = vsub.s32 %v360, %v362
        %v364 = vrot.slane %v356, %v363
        %v366 = vunpack.c.l.s4 1983009808
        %v367 = vunpack.c.0.s8 %v366
        %v368 = vlaneseq
        %v369 = vshrl.u32 %v368, 7
        %v370 = vsub.s32 %v367, %v369
        %v371 = vrot.slane %v357, %v370
        %v372 = vcombine.low %v316, %v332
        %v373 = vcombine.high %v316, %v332
        %v375 = vunpack.c.l.s4 1934713408
        %v376 = vunpack.c.0.s8 %v375
        %v377 = vlaneseq
        %v378 = vshrl.u32 %v377, 7
        %v379 = vsub.s32 %v376, %v378
        %v380 = vrot.slane %v372, %v379
        %v382 = vunpack.c.l.s4 1934713408
        %v383 = vunpack.c.0.s8 %v382
        %v384 = vlaneseq
        %v385 = vshrl.u32 %v384, 7
        %v386 = vsub.s32 %v383, %v385
        %v387 = vrot.slane %v373, %v386
        %v388 = vcombine.low %v323, %v339
        %v389 = vcombine.high %v323, %v339
        %v391 = vunpack.c.l.s4 1934713408
        %v392 = vunpack.c.0.s8 %v391
        %v393 = vlaneseq
        %v394 = vshrl.u32 %v393, 7
        %v395 = vsub.s32 %v392, %v394
        %v396 = vrot.slane %v388, %v395
        %v398 = vunpack.c.l.s4 1934713408
        %v399 = vunpack.c.0.s8 %v398
        %v400 = vlaneseq
        %v401 = vshrl.u32 %v400, 7
        %v402 = vsub.s32 %v399, %v401
        %v403 = vrot.slane %v389, %v402
        %v404 = vcombine.low %v348, %v364
        %v405 = vcombine.high %v348, %v364
        %v407 = vunpack.c.l.s4 1934713408
        %v408 = vunpack.c.0.s8 %v407
        %v409 = vlaneseq
        %v410 = vshrl.u32 %v409, 7
        %v411 = vsub.s32 %v408, %v410
        %v412 = vrot.slane %v404, %v411
        %v414 = vunpack.c.l.s4 1934713408
        %v415 = vunpack.c.0.s8 %v414
        %v416 = vlaneseq
        %v417 = vshrl.u32 %v416, 7
        %v418 = vsub.s32 %v415, %v417
        %v419 = vrot.slane %v405, %v418
        %v420 = vcombine.low %v355, %v371
        %v421 = vcombine.high %v355, %v371
        %v423 = vunpack.c.l.s4 1934713408
        %v424 = vunpack.c.0.s8 %v423
        %v425 = vlaneseq
        %v426 = vshrl.u32 %v425, 7
        %v427 = vsub.s32 %v424, %v426
        %v428 = vrot.slane %v420, %v427
        %v430 = vunpack.c.l.s4 1934713408
        %v431 = vunpack.c.0.s8 %v430
        %v432 = vlaneseq
        %v433 = vshrl.u32 %v432, 7
        %v434 = vsub.s32 %v431, %v433
        %v435 = vrot.slane %v421, %v434
        %v436 = vcombine.low %v380, %v412
        %v437 = vcombine.high %v380, %v412
        %v438 = vcombine.low %v387, %v419
        %v439 = vcombine.high %v387, %v419
        %v440 = vcombine.low %v396, %v428
        %v441 = vcombine.high %v396, %v428
        %v442 = vcombine.low %v403, %v435
        %v443 = vcombine.high %v403, %v435
        %v444 = vcombine.low %v436, %v438
        %v445 = vcombine.high %v436, %v438
        %v447 = vunpack.c.l.s4 1983009808
        %v448 = vunpack.c.0.s8 %v447
        %v449 = vlaneseq
        %v450 = vshrl.u32 %v449, 7
        %v451 = vsub.s32 %v448, %v450
        %v452 = vrot.slane %v444, %v451
        %v454 = vunpack.c.l.s4 1983009808
        %v455 = vunpack.c.0.s8 %v454
        %v456 = vlaneseq
        %v457 = vshrl.u32 %v456, 7
        %v458 = vsub.s32 %v455, %v457
        %v459 = vrot.slane %v445, %v458
        %v460 = vcombine.low %v437, %v439
        %v461 = vcombine.high %v437, %v439
        %v463 = vunpack.c.l.s4 1983009808
        %v464 = vunpack.c.0.s8 %v463
        %v465 = vlaneseq
        %v466 = vshrl.u32 %v465, 7
        %v467 = vsub.s32 %v464, %v466
        %v468 = vrot.slane %v460, %v467
        %v470 = vunpack.c.l.s4 1983009808
        %v471 = vunpack.c.0.s8 %v470
        %v472 = vlaneseq
        %v473 = vshrl.u32 %v472, 7
        %v474 = vsub.s32 %v471, %v473
        %v475 = vrot.slane %v461, %v474
        %v476 = vcombine.low %v440, %v442
        %v477 = vcombine.high %v440, %v442
        %v479 = vunpack.c.l.s4 1983009808
        %v480 = vunpack.c.0.s8 %v479
        %v481 = vlaneseq
        %v482 = vshrl.u32 %v481, 7
        %v483 = vsub.s32 %v480, %v482
        %v484 = vrot.slane %v476, %v483
        %v486 = vunpack.c.l.s4 1983009808
        %v487 = vunpack.c.0.s8 %v486
        %v488 = vlaneseq
        %v489 = vshrl.u32 %v488, 7
        %v490 = vsub.s32 %v487, %v489
        %v491 = vrot.slane %v477, %v490
        %v492 = vcombine.low %v441, %v443
        %v493 = vcombine.high %v441, %v443
        %v495 = vunpack.c.l.s4 1983009808
        %v496 = vunpack.c.0.s8 %v495
        %v497 = vlaneseq
        %v498 = vshrl.u32 %v497, 7
        %v499 = vsub.s32 %v496, %v498
        %v500 = vrot.slane %v492, %v499
        %v502 = vunpack.c.l.s4 1983009808
        %v503 = vunpack.c.0.s8 %v502
        %v504 = vlaneseq
        %v505 = vshrl.u32 %v504, 7
        %v506 = vsub.s32 %v503, %v505
        %v507 = vrot.slane %v493, %v506
        %v508 = vcombine.low %v452, %v468
        %v509 = vcombine.high %v452, %v468
        %v511 = vunpack.c.l.s4 1934713408
        %v512 = vunpack.c.0.s8 %v511
        %v513 = vlaneseq
        %v514 = vshrl.u32 %v513, 7
        %v515 = vsub.s32 %v512, %v514
        %v516 = vrot.slane %v508, %v515
        %v518 = vunpack.c.l.s4 1934713408
        %v519 = vunpack.c.0.s8 %v518
        %v520 = vlaneseq
        %v521 = vshrl.u32 %v520, 7
        %v522 = vsub.s32 %v519, %v521
        %v523 = vrot.slane %v509, %v522
        %v524 = vcombine.low %v459, %v475
        %v525 = vcombine.high %v459, %v475
        %v527 = vunpack.c.l.s4 1934713408
        %v528 = vunpack.c.0.s8 %v527
        %v529 = vlaneseq
        %v530 = vshrl.u32 %v529, 7
        %v531 = vsub.s32 %v528, %v530
        %v532 = vrot.slane %v524, %v531
        %v534 = vunpack.c.l.s4 1934713408
        %v535 = vunpack.c.0.s8 %v534
        %v536 = vlaneseq
        %v537 = vshrl.u32 %v536, 7
        %v538 = vsub.s32 %v535, %v537
        %v539 = vrot.slane %v525, %v538
        %v540 = vcombine.low %v484, %v500
        %v541 = vcombine.high %v484, %v500
        %v543 = vunpack.c.l.s4 1934713408
        %v544 = vunpack.c.0.s8 %v543
        %v545 = vlaneseq
        %v546 = vshrl.u32 %v545, 7
        %v547 = vsub.s32 %v544, %v546
        %v548 = vrot.slane %v540, %v547
        %v550 = vunpack.c.l.s4 1934713408
        %v551 = vunpack.c.0.s8 %v550
        %v552 = vlaneseq
        %v553 = vshrl.u32 %v552, 7
        %v554 = vsub.s32 %v551, %v553
        %v555 = vrot.slane %v541, %v554
        %v556 = vcombine.low %v491, %v507
        %v557 = vcombine.high %v491, %v507
        %v559 = vunpack.c.l.s4 1934713408
        %v560 = vunpack.c.0.s8 %v559
        %v561 = vlaneseq
        %v562 = vshrl.u32 %v561, 7
        %v563 = vsub.s32 %v560, %v562
        %v564 = vrot.slane %v556, %v563
        %v566 = vunpack.c.l.s4 1934713408
        %v567 = vunpack.c.0.s8 %v566
        %v568 = vlaneseq
        %v569 = vshrl.u32 %v568, 7
        %v570 = vsub.s32 %v567, %v569
        %v571 = vrot.slane %v557, %v570
        %v572 = vcombine.low %v516, %v548
        %v573 = vcombine.high %v516, %v548
        %v574 = vcombine.low %v523, %v555
        %v575 = vcombine.high %v523, %v555
        %v576 = vcombine.low %v532, %v564
        %v577 = vcombine.high %v532, %v564
        %v578 = vcombine.low %v539, %v571
        %v579 = vcombine.high %v539, %v571
        %581 = vrot.lane.b32.xlu0 %v573, 4
        %v582 = vpop.permute.xlu0 %581
        %585 = vrot.lane.b32.xlu0 %v574, 8
        %v586 = vpop.permute.xlu0 %585
        %589 = vrot.lane.b32.xlu0 %v575, 12
        %v590 = vpop.permute.xlu0 %589
        %593 = vrot.lane.b32.xlu0 %v576, 16
        %v594 = vpop.permute.xlu0 %593
        %597 = vrot.lane.b32.xlu0 %v577, 20
        %v598 = vpop.permute.xlu0 %597
        %601 = vrot.lane.b32.xlu0 %v578, 24
        %v602 = vpop.permute.xlu0 %601
        %605 = vrot.lane.b32.xlu0 %v579, 28
        %v606 = vpop.permute.xlu0 %605
        %vm608 = vcmask 31744
        %v609 = vsel %vm608, %v572, %v582
        %vm610 = vcmask 64512
        %v611 = vsel %vm610, %v609, %v586
        %vm612 = vcmask 97280
        %v613 = vsel %vm612, %v611, %v590
        %vm614 = vcmask 130048
        %v615 = vsel %vm614, %v613, %v594
        %vm616 = vcmask 162816
        %v617 = vsel %vm616, %v615, %v598
        %vm618 = vcmask 195584
        %v619 = vsel %vm618, %v617, %v602
        %vm620 = vcmask 228352
        %v621 = vsel %vm620, %v619, %v606
        %vm622 = vcmask 261120
        %623 = vst.msk [vmem:[%s148] sm:$0xff] %vm622, %v621
        %s624 = sand.u32 %s68, 1
        %s625 = scalar_lea.sflag [#allocation4], %s624
        %s626 = sand.u32 %s68, 1
        %s627 = smul.addr %s626, 8
        %s628 = scalar_lea.vmem [#allocation5], %s627
        // Predicated region
        $region29: #{tpu_custom_call.1} parent=23 // pred_check
          %p629 = pneg %p78
        $region30: #{tpu_custom_call.1} parent=23 // pred_check_branch
          %631 = sbr.rel (%p629) target = $region32
        $region31: #{tpu_custom_call.1} parent=23 // pred_region
          %s633 = ssub.s32 128, 128
          %634 = vsyncadd %s625, %s633
          %s635 = sadd.s32 %s23, %s22
          %s636 = smul.addr %s635, 128
          %s637 = scalar_lea.hbm %s1, %s636
          %s639 = sshll.u32 %s628, 4
          %s640 = int_to_ptr.vmem [resolvable:$true] %s639
          %642 = dma.vmem_to_hbm [thread:$0]  %s640, 128, %s637, %s625
        $region32: #{tpu_custom_call.1} parent=23 // pred_fallthru
          _
      $region24: #{tpu_custom_call.1} parent=5 // pred_fallthru
        _
      %p643 = scmp.le.s32.totalorder 2, %s13
      // Predicated region
      $region33: #{tpu_custom_call.1} parent=5 // pred_check
        %p644 = pneg %p643
      $region34: #{tpu_custom_call.1} parent=5 // pred_check_branch
        %646 = sbr.rel (%p644) target = $region36
      $region35: #{tpu_custom_call.1} parent=5 // pred_region
        %s647 = ssub.s32 %s13, 2
        // Predicated region
        $region37: #{tpu_custom_call.1} parent=35 // pred_check
          %p648 = pneg %p84
        $region38: #{tpu_custom_call.1} parent=35 // pred_check_branch
          %650 = sbr.rel (%p648) target = $region40
        $region39: #{tpu_custom_call.1} parent=35 // pred_region
          %s651 = sand.u32 %s69, 1
          %s652 = scalar_lea.sflag [#allocation4], %s651
          %s653 = sand.u32 %s69, 1
          %s654 = smul.addr %s653, 8
          %s655 = scalar_lea.vmem [#allocation5], %s654
          %656 = dma.done %s652, 128
        $region40: #{tpu_custom_call.1} parent=35 // pred_fallthru
          _
      $region36: #{tpu_custom_call.1} parent=5 // pred_fallthru
        _
    $region6: #{tpu_custom_call.1} parent=1 // loop_footer
      %s17 = sadd.s32 1, %s13
    $region7: #{tpu_custom_call.1} parent=1 // loop_footer_branch
      %12 = sbr.rel target = $region3
    $region8: #{tpu_custom_call.1} parent=1 // loop_exit
      _
    %657 = vsyncpa [#allocation3], 1
    %s658 = scalar_lea.sflag [#allocation3], 1
    %659 = vsyncpa %s658, 1
    %660 = vsyncpa [#allocation4], 1
    %s661 = scalar_lea.sflag [#allocation4], 1
    %662 = vsyncpa %s661, 1

</llo_original>
